<compile_context>
chip_gen: v6e
topology: v6e:2x2x1
jax: 0.10.0
libtpu: 0.0.40
codegen_flags: <defaults>
</compile_context>

<pallas_src>
import functools

import jax
import jax.numpy as jnp
from jax.experimental import pallas as pl
from jax.experimental.pallas import tpu as pltpu


def _round_up(x, m):
    return ((x + m - 1) // m) * m


_SUBLANE = {4: 8, 2: 16, 1: 32}   # sublane-packing multiple for block_rows, by itemsize


def _choose_tiling(T, V, itemsize, budget_bytes):
    """Pick (block_rows, vocab_chunk).

    VMEM accounting: double-buffered *native-dtype* logits tile plus ~3 f32-sized
    per-element temporaries the body materializes (f32 cast / exp tile / select tile),
    i.e. ~(2*itemsize + 12) bytes per tile element.
    """
    sub = _SUBLANE.get(itemsize, 8)
    per_elem = 2 * itemsize + 12

    rows_cap = budget_bytes // (per_elem * V)
    rows_cap = (rows_cap // sub) * sub
    if rows_cap >= sub:
        # Full-vocab blocks. block_rows is the sublane dim: a multiple of `sub` is enough
        # (no 128 floor); cap at 1024 rows to bound per-step latency.
        br = min(rows_cap, 1024, _round_up(T, sub))
        br = max(sub, (br // sub) * sub)
        return br, V

    # Vocab too wide even for a `sub`-row full-width tile: tile the vocab axis (128-aligned
    # chunks) and use the online-logsumexp path inside the kernel.
    br = min(256, _round_up(T, sub))
    br = max(sub, (br // sub) * sub)
    vc = (budget_bytes // (per_elem * br)) // 128 * 128
    vc = max(128, vc)
    vc = min(vc, _round_up(V, 128))
    return br, vc


def _ce_kernel(logits_ref, tgt_ref, out_ref, m_ref, l_ref, p_ref, *,
               total_rows, vocab_size, needs_col_mask):
    """Online-logsumexp cross entropy over (block_rows, vocab_chunk) tiles.

    Grid = (row_blocks ["parallel"], vocab_chunks ["arbitrary"]). Scratch m/l/p carry the
    running max, scaled exp-sum and picked target logit across vocab chunks; the last
    chunk emits the per-row-block partial CE sum (row-validity mask applied first).
    """
    i = pl.program_id(0)          # row-block index
    k = pl.program_id(1)          # vocab-chunk index
    nk = pl.num_programs(1)
    br, vc = logits_ref.shape

    @pl.when(k == 0)
    def _():
        m_ref[...] = jnp.full((br, 1), -jnp.inf, dtype=jnp.float32)
        l_ref[...] = jnp.zeros((br, 1), jnp.float32)
        p_ref[...] = jnp.zeros((br, 1), jnp.float32)

    x = logits_ref[...]                                   # native dtype (bf16 stays bf16)
    tgt = tgt_ref[...]                                    # (br, 1) int32

    # (1, vc) lane iota broadcast against (br, 1) targets: no (br, vc) int32 temp.
    col_ids = k * vc + jax.lax.broadcasted_iota(jnp.int32, (1, vc), 1)

    # Target pick: exact in the native dtype (one-hot select, at most one hit per row).
    # TODO(synk): torch ignore_index=-100 / out-of-range targets are not handled.
    hit = col_ids == tgt
    picked = jnp.sum(jnp.where(hit, x, jnp.array(0, dtype=x.dtype)),
                     axis=-1, keepdims=True)
    p_ref[...] += picked.astype(jnp.float32)

    # Row max is exact in the native dtype; mask the partial vocab tail chunk if needed.
    if needs_col_mask:
        x_m = jnp.where(col_ids < vocab_size, x, jnp.array(-jnp.inf, dtype=x.dtype))
    else:
        x_m = x
    chunk_max = jnp.max(x_m, axis=-1, keepdims=True).astype(jnp.float32)

    m_old = m_ref[...]
    m_new = jnp.maximum(m_old, chunk_max)
    alpha = jnp.exp(m_old - m_new)

    # Only the exp input needs f32 (x - max is exact in f32 for bf16 inputs).
    e = jnp.exp(x_m.astype(jnp.float32) - m_new)          # masked cols -> exp(-inf) = 0
    # TODO(synk): if VALU is the binding slot (v6e/v7x), this lane reduction can be
    # offloaded to the idle MXU via jnp.dot(e, ones((vc, 1)), preferred_element_type=f32).
    l_ref[...] = alpha * l_ref[...] + jnp.sum(e, axis=-1, keepdims=True)
    m_ref[...] = m_new

    @pl.when(k == nk - 1)
    def _():
        ce = (m_ref[...] + jnp.log(l_ref[...])) - p_ref[...]        # (br, 1) per-row CE
        row_ids = i * br + jax.lax.broadcasted_iota(jnp.int32, (br, 1), 0)
        ce = jnp.where(row_ids < total_rows, ce, 0.0)               # mask BEFORE the sum
        out_ref[...] = jnp.sum(ce, keepdims=True)                   # (1, 1) partial sum


def mask_criterion(logits, target, mask, *, block_rows=None, vocab_chunk=None,
                   vmem_limit_bytes=32 * 1024 * 1024):
    """logits: (N, seq_len-1, V) float; target: (N, seq_len) int; mask: (N, seq_len)."""
    N, Lm1, V = logits.shape
    T = N * Lm1

    logits_flat = logits.reshape(T, V)          # contiguous reshape only: no pad, no upcast
    tgt = target[:, 1:].reshape(-1).astype(jnp.int32)
    msk = mask[:, 1:].reshape(-1).astype(jnp.float32)

    itemsize = jnp.dtype(logits.dtype).itemsize
    budget = (vmem_limit_bytes * 3) // 4        # headroom for the tiny side buffers
    auto_br, auto_vc = _choose_tiling(T, V, itemsize, budget)
    if block_rows is None:
        block_rows = auto_br
    if vocab_chunk is None:
        vocab_chunk = auto_vc

    num_row_blocks = pl.cdiv(T, block_rows)
    num_vchunks = pl.cdiv(V, vocab_chunk)
    T_pad = num_row_blocks * block_rows
    needs_col_mask = (num_vchunks * vocab_chunk != V)

    # Targets are tiny: pad them (the big logits array is never padded or copied).
    tgt_col = jnp.pad(tgt, (0, T_pad - T)).reshape(T_pad, 1)

    kernel = functools.partial(_ce_kernel, total_rows=T, vocab_size=V,
                               needs_col_mask=needs_col_mask)

    partial_sums = pl.pallas_call(
        kernel,
        out_shape=jax.ShapeDtypeStruct((num_row_blocks, 1), jnp.float32),
        grid_spec=pltpu.PrefetchScalarGridSpec(
            num_scalar_prefetch=0,
            grid=(num_row_blocks, num_vchunks),
            in_specs=[
                pl.BlockSpec((block_rows, vocab_chunk), lambda i, k: (i, k)),  # logits
                pl.BlockSpec((block_rows, 1), lambda i, k: (i, 0)),            # targets
            ],
            out_specs=pl.BlockSpec((1, 1), lambda i, k: (i, 0)),
            scratch_shapes=[
                pltpu.VMEM((block_rows, 1), jnp.float32),   # running max m
                pltpu.VMEM((block_rows, 1), jnp.float32),   # running scaled exp-sum l
                pltpu.VMEM((block_rows, 1), jnp.float32),   # picked target logit
            ],
        ),
        compiler_params=pltpu.CompilerParams(
            dimension_semantics=("parallel", "arbitrary"),
            vmem_limit_bytes=vmem_limit_bytes,
        ),
        cost_estimate=pl.CostEstimate(
            flops=6 * T * V,                 # max / sub / cmp / select / fma passes
            transcendentals=T * V,           # exp
            bytes_accessed=T * V * itemsize + T_pad * 4 + num_row_blocks * 4,
        ),
    )(logits_flat, tgt_col)

    # Tiny epilogue in plain JAX (num_row_blocks-sized reduction + scalar math).
    loss = jnp.sum(partial_sums) / jnp.float32(T)   # CrossEntropyLoss(reduction='mean')
    msum = jnp.sum(msk)
    # == sum(loss*mask)/sum(mask): loss when any mask is set, NaN (torch 0/0) otherwise.
    return jnp.where(msum > 0, loss, jnp.float32(jnp.nan))


def _reference(logits, target, mask):
    """Plain-JAX reference matching torch nn.CrossEntropyLoss(reduction='mean')."""
    N, Lm1, V = logits.shape
    tgt = target[:, 1:].reshape(-1)
    msk = mask[:, 1:].reshape(-1).astype(jnp.float32)
    lg = logits.reshape(N * Lm1, V).astype(jnp.float32)
    logp = jax.nn.log_softmax(lg, axis=-1)
    ce = -jnp.take_along_axis(logp, tgt[:, None], axis=-1)[:, 0]
    loss = jnp.mean(ce)
    return jnp.sum(loss * msk) / jnp.sum(msk)


if __name__ == "__main__":
    key = jax.random.PRNGKey(0)
    k1, k2, k3, k4 = jax.random.split(key, 4)

    N, seq_len, V = 2, 8, 32
    logits = jax.random.normal(k1, (N, seq_len - 1, V), dtype=jnp.float32)
    target = jax.random.randint(k2, (N, seq_len), 0, V, dtype=jnp.int32)
    mask = (jax.random.uniform(k3, (N, seq_len)) > 0.3).astype(jnp.float32)

    ref = jax.block_until_ready(_reference(logits, target, mask))

    # Auto-tiled single-block path.
    out = jax.block_until_ready(mask_criterion(logits, target, mask))
    assert jnp.allclose(out, ref, atol=1e-5, rtol=1e-5), (out, ref)

    # Multi-row-block path with a partial tail block (exercises in-kernel row masking).
    out2 = jax.block_until_ready(mask_criterion(logits, target, mask, block_rows=8))
    assert jnp.allclose(out2, ref, atol=1e-5, rtol=1e-5), (out2, ref)

    # Native bf16 logits streamed through HBM; max/pick stay bf16, only exp input is f32.
    logits_bf16 = logits.astype(jnp.bfloat16)
    ref_bf16 = jax.block_until_ready(_reference(logits_bf16, target, mask))
    out3 = jax.block_until_ready(mask_criterion(logits_bf16, target, mask))
    assert jnp.allclose(out3, ref_bf16, atol=1e-5, rtol=1e-5), (out3, ref_bf16)

    # Vocab-chunked online-logsumexp path with a partial vocab tail chunk
    # (V=320 with 128-wide chunks -> 3 chunks, last one column-masked).
    V2 = 320
    logits2 = jax.random.normal(k4, (N, seq_len - 1, V2), dtype=jnp.float32)
    target2 = jax.random.randint(k2, (N, seq_len), 0, V2, dtype=jnp.int32)
    ref2 = jax.block_until_ready(_reference(logits2, target2, mask))
    out4 = jax.block_until_ready(
        mask_criterion(logits2, target2, mask, block_rows=8, vocab_chunk=128))
    assert jnp.allclose(out4, ref2, atol=1e-5, rtol=1e-5), (out4, ref2)

    print("KERNEL_OK")
</pallas_src>

<mosaic_0001>
module attributes {stable_mosaic.version = 11 : i64} {
  func.func @_ce_kernel(%arg0: i32, %arg1: i32, %arg2: memref<16x32xf32, #tpu.memory_space<vmem>>, %arg3: memref<16x1xi32, #tpu.memory_space<vmem>>, %arg4: memref<1x1xf32, #tpu.memory_space<vmem>>, %arg5: memref<16x1xf32, #tpu.memory_space<vmem>>, %arg6: memref<16x1xf32, #tpu.memory_space<vmem>>, %arg7: memref<16x1xf32, #tpu.memory_space<vmem>>) attributes {dimension_semantics = [#tpu.dimension_semantics<parallel>, #tpu.dimension_semantics<arbitrary>], iteration_bounds = array<i64: 1, 1>, scalar_prefetch = 0 : i64, scratch_operands = 3 : i64, tpu.core_type = #tpu.core_type<tc>, window_params = [{transform_indices = @transform_0, window_bounds = array<i64: 16, 32>}, {transform_indices = @transform_1, window_bounds = array<i64: 16, 1>}, {transform_indices = @transform_2, window_bounds = array<i64: 1, 1>}]} {
    %c0_i32 = arith.constant 0 : i32
    %0 = arith.cmpi eq, %arg1, %c0_i32 : i32
    %1 = arith.extui %0 : i1 to i32
    %c0_i32_0 = arith.constant 0 : i32
    %2 = arith.cmpi ne, %1, %c0_i32_0 : i32
    scf.if %2 {
      %cst_21 = arith.constant 0xFF800000 : f32
      %38 = vector.broadcast %cst_21 : f32 to vector<16x1xf32>
      %c0_22 = arith.constant 0 : index
      %c0_23 = arith.constant 0 : index
      %39 = vector.load %arg5[%c0_22, %c0_23] : memref<16x1xf32, #tpu.memory_space<vmem>>, vector<16x1xf32>
      tpu.vector_store %arg5[%c0_22, %c0_23], %38 {strides = array<i32>} : memref<16x1xf32, #tpu.memory_space<vmem>>, vector<16x1xf32>,
      %cst_24 = arith.constant 0.000000e+00 : f32
      %40 = vector.broadcast %cst_24 : f32 to vector<16x1xf32>
      %c0_25 = arith.constant 0 : index
      %c0_26 = arith.constant 0 : index
      %41 = vector.load %arg6[%c0_25, %c0_26] : memref<16x1xf32, #tpu.memory_space<vmem>>, vector<16x1xf32>
      tpu.vector_store %arg6[%c0_25, %c0_26], %40 {strides = array<i32>} : memref<16x1xf32, #tpu.memory_space<vmem>>, vector<16x1xf32>,
      %cst_27 = arith.constant 0.000000e+00 : f32
      %42 = vector.broadcast %cst_27 : f32 to vector<16x1xf32>
      %c0_28 = arith.constant 0 : index
      %c0_29 = arith.constant 0 : index
      %43 = vector.load %arg7[%c0_28, %c0_29] : memref<16x1xf32, #tpu.memory_space<vmem>>, vector<16x1xf32>
      tpu.vector_store %arg7[%c0_28, %c0_29], %42 {strides = array<i32>} : memref<16x1xf32, #tpu.memory_space<vmem>>, vector<16x1xf32>,
    } else {
    }
    %c0 = arith.constant 0 : index
    %c0_1 = arith.constant 0 : index
    %3 = vector.load %arg2[%c0, %c0_1] : memref<16x32xf32, #tpu.memory_space<vmem>>, vector<16x32xf32>
    %c0_2 = arith.constant 0 : index
    %c0_3 = arith.constant 0 : index
    %4 = vector.load %arg3[%c0_2, %c0_3] : memref<16x1xi32, #tpu.memory_space<vmem>>, vector<16x1xi32>
    %c32_i32 = arith.constant 32 : i32
    %5 = arith.muli %arg1, %c32_i32 : i32
    %6 = tpu.iota {dimensions = array<i32: 1>} : vector<1x32xi32>
    %7 = vector.broadcast %5 : i32 to vector<1x32xi32>
    %8 = arith.addi %7, %6 : vector<1x32xi32>
    %9 = vector.broadcast %8 : vector<1x32xi32> to vector<16x32xi32>
    %10 = vector.broadcast %4 : vector<16x1xi32> to vector<16x32xi32>
    %11 = arith.cmpi eq, %9, %10 : vector<16x32xi32>
    %cst = arith.constant 0.000000e+00 : f32
    %12 = vector.broadcast %cst : f32 to vector<16x32xf32>
    %13 = arith.select %11, %3, %12 : vector<16x32xi1>, vector<16x32xf32>
    %cst_4 = arith.constant dense<0.000000e+00> : vector<16xf32>
    %14 = vector.multi_reduction <add>, %13, %cst_4 [1] : vector<16x32xf32> to vector<16xf32>
    %15 = vector.shape_cast %14 : vector<16xf32> to vector<16x1xf32>
    %c0_5 = arith.constant 0 : index
    %c0_6 = arith.constant 0 : index
    %16 = vector.load %arg7[%c0_5, %c0_6] : memref<16x1xf32, #tpu.memory_space<vmem>>, vector<16x1xf32>
    %17 = arith.addf %16, %15 : vector<16x1xf32>
    %c0_7 = arith.constant 0 : index
    %c0_8 = arith.constant 0 : index
    %18 = vector.load %arg7[%c0_7, %c0_8] : memref<16x1xf32, #tpu.memory_space<vmem>>, vector<16x1xf32>
    tpu.vector_store %arg7[%c0_7, %c0_8], %17 {strides = array<i32>} : memref<16x1xf32, #tpu.memory_space<vmem>>, vector<16x1xf32>,
    %cst_9 = arith.constant dense<0xFF800000> : vector<16xf32>
    %19 = vector.multi_reduction <maximumf>, %3, %cst_9 [1] : vector<16x32xf32> to vector<16xf32>
    %20 = vector.shape_cast %19 : vector<16xf32> to vector<16x1xf32>
    %c0_10 = arith.constant 0 : index
    %c0_11 = arith.constant 0 : index
    %21 = vector.load %arg5[%c0_10, %c0_11] : memref<16x1xf32, #tpu.memory_space<vmem>>, vector<16x1xf32>
    %22 = arith.maximumf %21, %20 : vector<16x1xf32>
    %23 = arith.subf %21, %22 : vector<16x1xf32>
    %24 = math.exp %23 : vector<16x1xf32>
    %25 = vector.broadcast %22 : vector<16x1xf32> to vector<16x32xf32>
    %26 = arith.subf %3, %25 : vector<16x32xf32>
    %27 = math.exp %26 : vector<16x32xf32>
    %c0_12 = arith.constant 0 : index
    %c0_13 = arith.constant 0 : index
    %28 = vector.load %arg6[%c0_12, %c0_13] : memref<16x1xf32, #tpu.memory_space<vmem>>, vector<16x1xf32>
    %29 = arith.mulf %24, %28 : vector<16x1xf32>
    %cst_14 = arith.constant dense<0.000000e+00> : vector<16xf32>
    %30 = vector.multi_reduction <add>, %27, %cst_14 [1] : vector<16x32xf32> to vector<16xf32>
    %31 = vector.shape_cast %30 : vector<16xf32> to vector<16x1xf32>
    %32 = arith.addf %29, %31 : vector<16x1xf32>
    %c0_15 = arith.constant 0 : index
    %c0_16 = arith.constant 0 : index
    %33 = vector.load %arg6[%c0_15, %c0_16] : memref<16x1xf32, #tpu.memory_space<vmem>>, vector<16x1xf32>
    tpu.vector_store %arg6[%c0_15, %c0_16], %32 {strides = array<i32>} : memref<16x1xf32, #tpu.memory_space<vmem>>, vector<16x1xf32>,
    %c0_17 = arith.constant 0 : index
    %c0_18 = arith.constant 0 : index
    %34 = vector.load %arg5[%c0_17, %c0_18] : memref<16x1xf32, #tpu.memory_space<vmem>>, vector<16x1xf32>
    tpu.vector_store %arg5[%c0_17, %c0_18], %22 {strides = array<i32>} : memref<16x1xf32, #tpu.memory_space<vmem>>, vector<16x1xf32>,
    %c0_i32_19 = arith.constant 0 : i32
    %35 = arith.cmpi eq, %arg1, %c0_i32_19 : i32
    %36 = arith.extui %35 : i1 to i32
    %c0_i32_20 = arith.constant 0 : i32
    %37 = arith.cmpi ne, %36, %c0_i32_20 : i32
    scf.if %37 {
      %c0_21 = arith.constant 0 : index
      %c0_22 = arith.constant 0 : index
      %38 = vector.load %arg5[%c0_21, %c0_22] : memref<16x1xf32, #tpu.memory_space<vmem>>, vector<16x1xf32>
      %c0_23 = arith.constant 0 : index
      %c0_24 = arith.constant 0 : index
      %39 = vector.load %arg6[%c0_23, %c0_24] : memref<16x1xf32, #tpu.memory_space<vmem>>, vector<16x1xf32>
      %40 = math.log %39 : vector<16x1xf32>
      %41 = arith.addf %38, %40 : vector<16x1xf32>
      %c0_25 = arith.constant 0 : index
      %c0_26 = arith.constant 0 : index
      %42 = vector.load %arg7[%c0_25, %c0_26] : memref<16x1xf32, #tpu.memory_space<vmem>>, vector<16x1xf32>
      %43 = arith.subf %41, %42 : vector<16x1xf32>
      %c16_i32 = arith.constant 16 : i32
      %44 = arith.muli %arg0, %c16_i32 : i32
      %45 = tpu.iota {dimensions = array<i32: 0>} : vector<16x1xi32>
      %46 = vector.broadcast %44 : i32 to vector<16x1xi32>
      %47 = arith.addi %46, %45 : vector<16x1xi32>
      %c14_i32 = arith.constant 14 : i32
      %48 = vector.broadcast %c14_i32 : i32 to vector<16x1xi32>
      %49 = arith.cmpi slt, %47, %48 : vector<16x1xi32>
      %cst_27 = arith.constant 0.000000e+00 : f32
      %50 = vector.broadcast %cst_27 : f32 to vector<16x1xf32>
      %51 = arith.select %49, %43, %50 : vector<16x1xi1>, vector<16x1xf32>
      %52 = vector.shape_cast %51 : vector<16x1xf32> to vector<1x16x1xf32>
      %cst_28 = arith.constant dense<0.000000e+00> : vector<1xf32>
      %53 = vector.multi_reduction <add>, %52, %cst_28 [1, 2] : vector<1x16x1xf32> to vector<1xf32>
      %54 = vector.shape_cast %53 : vector<1xf32> to vector<1x1x1xf32>
      %55 = vector.extract %54[0, 0, 0] : f32 from vector<1x1x1xf32>
      %56 = vector.broadcast %55 : f32 to vector<1x1xf32>
      %c0_29 = arith.constant 0 : index
      %c0_30 = arith.constant 0 : index
      %57 = vector.load %arg4[%c0_29, %c0_30] : memref<1x1xf32, #tpu.memory_space<vmem>>, vector<1x1xf32>
      tpu.vector_store %arg4[%c0_29, %c0_30], %56 {strides = array<i32>} : memref<1x1xf32, #tpu.memory_space<vmem>>, vector<1x1xf32>,
    } else {
    }
    return
  }
  func.func @transform_0(%arg0: i32, %arg1: i32) -> (i32, i32) {
    %c0_i32 = arith.constant 0 : i32
    return %arg0, %arg1 : i32, i32
  }
  func.func @transform_1(%arg0: i32, %arg1: i32) -> (i32, i32) {
    %c0_i32 = arith.constant 0 : i32
    %c0_i32_0 = arith.constant 0 : i32
    return %arg0, %c0_i32 : i32, i32
  }
  func.func @transform_2(%arg0: i32, %arg1: i32) -> (i32, i32) {
    %c0_i32 = arith.constant 0 : i32
    %c0_i32_0 = arith.constant 0 : i32
    return %arg0, %c0_i32 : i32, i32
  }
}

</mosaic_0001>

<llo_original>
// kernel: tpu_custom_call.1
$region0: #{tpu_custom_call.1}
  #allocation0 [shape = 'u32[]', space=smem, size = 0x4, offset = 0x4, fixed_abs, tag = 'smem constant byte address 0x4 - core index']
  #allocation1 [shape = 'u32[144,128]{1,0:T(1,128)}', space=vmem, size = 0x12000, scoped, tag = 'internal scratch']
  #allocation2 [shape = 'f32[16,1]{1,0:T(8,128)}', space=vmem, size = 0x2000, scoped, tag = 'scratch operand']
  #allocation3 [shape = 'f32[16,1]{1,0:T(8,128)}', space=vmem, size = 0x2000, scoped, tag = 'scratch operand']
  #allocation4 [shape = 'f32[16,1]{1,0:T(8,128)}', space=vmem, size = 0x2000, scoped, tag = 'scratch operand']
  %s0 = inlined_call_operand.vmem [shape: f32[14,32], index: 0, kind: input, shape index: {}]
  %s1 = inlined_call_operand.vmem [shape: s32[16,1], index: 1, kind: input, shape index: {}]
  %s2 = inlined_call_operand.hbm [shape: f32[1,1], index: 2, kind: output, shape index: {}]
  %s3 = sld [smem:[#allocation0]]
  $region26: #{tpu_custom_call.1} parent=0
    _
  %s5 = ssub.s32 1, %s3
  %s6 = scalar_select 0, %s5, %s3
  $region1: #{tpu_custom_call.1} parent=0
    #allocation5 [shape = 'u8[512]{0}', space=vmem, size = 0x400, scoped, tag = 'output window, operand 0, single buffered']
    #allocation6 [shape = 's32[1]{0}', space=sflag, size = 0x4, scoped, tag = 'scoped memory for tpu_custom_call.1']
    %7 = vsyncpa [#allocation6], 0
    // Predicated region
    $region2: #{tpu_custom_call.1} parent=1 // pred_check
      _
    $region3: #{tpu_custom_call.1} parent=1 // pred_check_branch
      %9 = sbr.rel (0) target = $region5
    $region4: #{tpu_custom_call.1} parent=1 // pred_region
      _
    $region5: #{tpu_custom_call.1} parent=1 // pred_fallthru
      _
    // Predicated region
    $region6: #{tpu_custom_call.1} parent=1 // pred_check
      _
    $region7: #{tpu_custom_call.1} parent=1 // pred_check_branch
      %11 = sbr.rel (0) target = $region9
    $region8: #{tpu_custom_call.1} parent=1 // pred_region
      _
    $region9: #{tpu_custom_call.1} parent=1 // pred_fallthru
      _
    %p12 = scmp.eq.s32.totalorder 0, 0
    // Predicated region
    $region10: #{tpu_custom_call.1} parent=1 // pred_check
      %p13 = pneg %p12
    $region11: #{tpu_custom_call.1} parent=1 // pred_check_branch
      %15 = sbr.rel (%p13) target = $region13
    $region12: #{tpu_custom_call.1} parent=1 // pred_region
      %vm16 = vcmask 7168
      %17 = vst.msk [vmem:[#allocation2] sm:$0xff] %vm16, -inf
      %18 = vst.msk [vmem:[#allocation2 + $0x8] sm:$0xff] %vm16, -inf
      %19 = vst.msk [vmem:[#allocation3] sm:$0xff] %vm16, 0.0
      %20 = vst.msk [vmem:[#allocation3 + $0x8] sm:$0xff] %vm16, 0.0
      %21 = vst.msk [vmem:[#allocation4] sm:$0xff] %vm16, 0.0
      %22 = vst.msk [vmem:[#allocation4 + $0x8] sm:$0xff] %vm16, 0.0
    $region13: #{tpu_custom_call.1} parent=1 // pred_fallthru
      _
    %v23 = vld [vmem:[%s0] sm:$0xff]
    %v24 = vld [vmem:[%s0 + $0x8] sm:$0xff]
    %v25 = vld [vmem:[%s1] sm:$0xff]
    %v26 = vld [vmem:[%s1 + $0x8] sm:$0xff]
    %s27 = smul.u32 0, 32
    %v28 = vlaneseq
    %v29 = vand.u32 %v28, 127
    %v30 = vstv %s27
    %v31 = vadd.s32 %v30, %v29
    %32 = vset.pattern.permute.xlu0 0
    %33 = vperm.xlu0 %32, %v25
    %v34 = vpop.permute.xlu0 %33
    %35 = vset.pattern.permute.xlu0 0
    %36 = vperm.xlu0 %35, %v26
    %v37 = vpop.permute.xlu0 %36
    %vm38 = vcmp.eq.s32.totalorder %v31, %v34
    %vm39 = vcmp.eq.s32.totalorder %v31, %v37
    %v40 = vsel %vm38, %v23, 0.0
    %v41 = vsel %vm39, %v24, 0.0
    %vm42 = vcmask 261120
    %v43 = vsel %vm42, %v40, 0.0
    %44 = vadd.xlane.f32.xlu0 %v43
    %v45 = vpop.xlane.xlu0 %44
    %v46 = vsel %vm42, %v41, 0.0
    %47 = vadd.xlane.f32.xlu0 %v46
    %v48 = vpop.xlane.xlu0 %47
    %v49 = vld [vmem:[#allocation4] sm:$0xff]
    %v50 = vld [vmem:[#allocation4 + $0x8] sm:$0xff]
    %v51 = vadd.f32 %v49, %v45
    %v52 = vadd.f32 %v50, %v48
    %vm53 = vcmask 7168
    %54 = vst.msk [vmem:[#allocation4] sm:$0xff] %vm53, %v51
    %55 = vst.msk [vmem:[#allocation4 + $0x8] sm:$0xff] %vm53, %v52
    %v56 = vsel %vm42, %v23, -inf
    %57 = vmax.xlane.f32.xlu0 %v56
    %v58 = vpop.xlane.xlu0 %57
    %v59 = vsel %vm42, %v24, -inf
    %60 = vmax.xlane.f32.xlu0 %v59
    %v61 = vpop.xlane.xlu0 %60
    %v62 = vld [vmem:[#allocation2] sm:$0xff]
    %v63 = vld [vmem:[#allocation2 + $0x8] sm:$0xff]
    %v64 = vmax.f32 %v62, %v58
    %v65 = vmax.f32 %v63, %v61
    %v66 = vsub.f32 %v62, %v64
    %v67 = vsub.f32 %v63, %v65
    %v68 = vmul.f32 %v66, 1.442695
    %v69 = vpow.pop %v68
    %v70 = vmul.f32 %v67, 1.442695
    %v71 = vpow.pop %v70
    %73 = vset.pattern.permute.xlu0 0
    %74 = vperm.xlu0 %73, %v64
    %v75 = vpop.permute.xlu0 %74
    %78 = vset.pattern.permute.xlu0 0
    %79 = vperm.xlu0 %78, %v65
    %v80 = vpop.permute.xlu0 %79
    %v82 = vsub.f32 %v23, %v75
    %v83 = vsub.f32 %v24, %v80
    %v84 = vmul.f32 %v82, 1.442695
    %v85 = vpow.pop %v84
    %v86 = vmul.f32 %v83, 1.442695
    %v87 = vpow.pop %v86
    %v88 = vld [vmem:[#allocation3] sm:$0xff]
    %v89 = vld [vmem:[#allocation3 + $0x8] sm:$0xff]
    %v90 = vmul.f32 %v69, %v88
    %v91 = vmul.f32 %v71, %v89
    %v92 = vsel %vm42, %v85, 0.0
    %93 = vadd.xlane.f32.xlu0 %v92
    %v94 = vpop.xlane.xlu0 %93
    %v95 = vsel %vm42, %v87, 0.0
    %96 = vadd.xlane.f32.xlu0 %v95
    %v97 = vpop.xlane.xlu0 %96
    %v98 = vadd.f32 %v90, %v94
    %v99 = vadd.f32 %v91, %v97
    %100 = vst.msk [vmem:[#allocation3] sm:$0xff] %vm53, %v98
    %101 = vst.msk [vmem:[#allocation3 + $0x8] sm:$0xff] %vm53, %v99
    %102 = vst.msk [vmem:[#allocation2] sm:$0xff] %vm53, %v64
    %103 = vst.msk [vmem:[#allocation2 + $0x8] sm:$0xff] %vm53, %v65
    // Predicated region
    $region14: #{tpu_custom_call.1} parent=1 // pred_check
      %p104 = pneg %p12
    $region15: #{tpu_custom_call.1} parent=1 // pred_check_branch
      %106 = sbr.rel (%p104) target = $region17
    $region16: #{tpu_custom_call.1} parent=1 // pred_region
      %v107 = vld [vmem:[#allocation2] sm:$0xff]
      %v108 = vld [vmem:[#allocation2 + $0x8] sm:$0xff]
      %v109 = vld [vmem:[#allocation3] sm:$0xff]
      %v110 = vld [vmem:[#allocation3 + $0x8] sm:$0xff]
      %v111 = vlog2.pop %v109
      %v112 = vmul.f32 %v111, 0.6931472
      %v113 = vlog2.pop %v110
      %v114 = vmul.f32 %v113, 0.6931472
      %v115 = vadd.f32 %v107, %v112
      %v116 = vadd.f32 %v108, %v114
      %v117 = vld [vmem:[#allocation4] sm:$0xff]
      %v118 = vld [vmem:[#allocation4 + $0x8] sm:$0xff]
      %v119 = vsub.f32 %v115, %v117
      %v120 = vsub.f32 %v116, %v118
      %s121 = smul.u32 0, 16
      %v122 = vlaneseq
      %v123 = vshrl.u32 %v122, 7
      %v124 = vadd.s32 %v123, 8
      %v125 = vstv %s121
      %v126 = vadd.s32 %v125, %v123
      %v127 = vadd.s32 %v125, %v124
      %vm128 = vcmp.lt.s32.totalorder %v126, 14
      %vm129 = vcmp.lt.s32.totalorder %v127, 14
      %v130 = vsel %vm128, %v119, 0.0
      %v131 = vsel %vm129, %v120, 0.0
      %v132 = vsel %vm53, %v130, 0.0
      %v133 = vsel %vm53, %v131, 0.0
      %v134 = vadd.f32 %v132, %v133
      %135 = vadd.xlane.f32.xlu0 %v134
      %v136 = vpop.xlane.xlu0 %135
      %v137 = vrot.slane %v136, 4
      %v138 = vadd.f32 %v136, %v137
      %v139 = vrot.slane %v138, 2
      %v140 = vadd.f32 %v138, %v139
      %v141 = vrot.slane %v140, 1
      %v142 = vadd.f32 %v140, %v141
      %s143 = vtos %v142
      %v144 = vstv %s143
      %vm145 = vcmask 0
      %146 = vst.msk [vmem:[#allocation5] sm:$0x1] %vm145, %v144
    $region17: #{tpu_custom_call.1} parent=1 // pred_fallthru
      _
    // Predicated region
    $region18: #{tpu_custom_call.1} parent=1 // pred_check
      _
    $region19: #{tpu_custom_call.1} parent=1 // pred_check_branch
      %148 = sbr.rel (0) target = $region21
    $region20: #{tpu_custom_call.1} parent=1 // pred_region
      %s150 = ssub.s32 16, 16
      %151 = vsyncadd [#allocation6], %s150
      %s153 = sshll.u32 [#allocation5], 4
      %s154 = int_to_ptr.vmem [resolvable:$true] %s153
      %156 = dma.vmem_to_hbm [thread:$0]  %s154, 16, %s2, [#allocation6]
    $region21: #{tpu_custom_call.1} parent=1 // pred_fallthru
      _
    // Predicated region
    $region22: #{tpu_custom_call.1} parent=1 // pred_check
      _
    $region23: #{tpu_custom_call.1} parent=1 // pred_check_branch
      %158 = sbr.rel (0) target = $region25
    $region24: #{tpu_custom_call.1} parent=1 // pred_region
      %159 = dma.done [#allocation6], 16
    $region25: #{tpu_custom_call.1} parent=1 // pred_fallthru
      _
    %160 = vsyncpa [#allocation6], 1

</llo_original>
